<compile_context>
chip_gen: v7x
topology: tpu7x:2x2x1
jax: 0.10.0
libtpu: 0.0.40
codegen_flags: <defaults>
</compile_context>

<pallas_src>
import jax
import jax.numpy as jnp
from jax import lax
from jax.experimental import pallas as pl
from jax.experimental.pallas import tpu as pltpu


def attention_head_kernel(x_ref, w_ref, b_ref, o_ref):
    # x_ref: (bt*T, Cp) f32 ; w_ref: (Cp, 3*Hp) bf16 = [Wk | Wq | Wv]
    # b_ref: (1, 3*Hp) f32  ; o_ref: (bt, T, Hp) f32
    bt, T, Hp = o_ref.shape

    # --- fused QKV projection: one wide 2-D MXU matmul over all bt*T folded rows ---
    x_bf16 = x_ref[...].astype(jnp.bfloat16)
    qkv = jnp.dot(x_bf16, w_ref[...], preferred_element_type=jnp.float32)
    qkv = qkv + b_ref[...]                       # (bt*T, 3Hp) f32, (1, 3Hp) bias broadcast
    qkv = qkv.reshape(bt, T, 3 * Hp)

    # 128-aligned lane slices -> free views, no relayout copies.
    K = qkv[:, :, 0 * Hp:1 * Hp]
    Q = qkv[:, :, 1 * Hp:2 * Hp]
    V = qkv[:, :, 2 * Hp:3 * Hp]

    # --- scores[b,q,k] = sum_h Q[b,q,h] K[b,k,h]  (== Q @ K.permute(0,2,1), no transpose op)
    scores = lax.dot_general(
        Q.astype(jnp.bfloat16), K.astype(jnp.bfloat16),
        dimension_numbers=(((2,), (2,)), ((0,), (0,))),
        preferred_element_type=jnp.float32,
    )                                            # (bt, T, T) f32

    # Causal tril + torch's "wei[wei == 0] = -inf" quirk in a single where-pass:
    # keep a score iff it is in the lower triangle AND not exactly zero.
    row = lax.broadcasted_iota(jnp.int32, (T, T), 0)
    col = lax.broadcasted_iota(jnp.int32, (T, T), 1)
    keep = (col <= row)[None, :, :] & (scores != 0.0)
    wei = jnp.where(keep, scores, jnp.float32(-jnp.inf))

    # --- row softmax in f32; divide goes to the (otherwise idle) EUP slot ----------
    m = jnp.max(wei, axis=-1, keepdims=True)
    p = jnp.exp(wei - m)
    denom = jnp.sum(p, axis=-1, keepdims=True)
    norm_wei = p * pl.reciprocal(denom, approx=True)

    out = lax.dot_general(
        norm_wei.astype(jnp.bfloat16), V.astype(jnp.bfloat16),
        dimension_numbers=(((2,), (1,)), ((0,), (0,))),
        preferred_element_type=jnp.float32,
    )                                            # (bt, T, Hp) f32
    o_ref[...] = out.astype(o_ref.dtype)


def _round_up(n, m):
    return ((n + m - 1) // m) * m


def attention_head(x, wk, bk, wq, bq, wv, bv, *, batch_tile=None):
    """x: (B, T, C) f32; wk/wq/wv: (C, H) pre-transposed torch weights; bk/bq/bv: (1, H).

    Returns (B, T, H) f32.
    """
    B, T, C = x.shape
    H = wk.shape[1]
    Cp = _round_up(C, 128)
    Hp = _round_up(H, 128)

    # Zero-pad the head dim per projection BEFORE the concat, so the Hp-boundary slices
    # inside the kernel stay per-projection; then fuse into [K | Q | V].
    def pad_cols(a, new_cols):
        return jnp.pad(a, ((0, 0), (0, new_cols - a.shape[1])))

    w_qkv = jnp.concatenate([pad_cols(wk, Hp), pad_cols(wq, Hp), pad_cols(wv, Hp)], axis=1)
    b_qkv = jnp.concatenate([pad_cols(bk, Hp), pad_cols(bq, Hp), pad_cols(bv, Hp)], axis=1)
    # Pad the contraction dim (zero rows / columns contribute nothing).
    w_qkv = jnp.pad(w_qkv, ((0, Cp - C), (0, 0))).astype(jnp.bfloat16)   # (Cp, 3Hp) bf16
    x_p = jnp.pad(x, ((0, 0), (0, 0), (0, Cp - C)))                      # (B, T, Cp) f32
    x2d = x_p.reshape(B * T, Cp)     # fold rows: projection becomes one 2-D matmul

    if batch_tile is None:
        # Keep >= 2 parallel grid steps when possible so both v7x TensorCores get work,
        # while still folding several batch elements per step at larger B.
        batch_tile = max(1, min(8, B // 2)) if B >= 2 else 1
    bt = batch_tile
    assert B % bt == 0, "batch_tile must divide B"
    grid = (B // bt,)

    out_p = pl.pallas_call(
        attention_head_kernel,
        out_shape=jax.ShapeDtypeStruct((B, T, Hp), x.dtype),
        grid_spec=pltpu.PrefetchScalarGridSpec(
            num_scalar_prefetch=0,
            grid=grid,
            in_specs=[
                pl.BlockSpec((bt * T, Cp), lambda b: (b, 0)),       # bt*T folded rows / step
                pl.BlockSpec((Cp, 3 * Hp), lambda b: (0, 0)),       # fused W: constant block
                pl.BlockSpec((1, 3 * Hp), lambda b: (0, 0)),        # fused b: constant block
            ],
            out_specs=pl.BlockSpec((bt, T, Hp), lambda b: (b, 0, 0)),
        ),
        compiler_params=pltpu.CompilerParams(
            dimension_semantics=("parallel",),
            vmem_limit_bytes=32 * 1024 * 1024,
        ),
    )(x2d, w_qkv, b_qkv)

    return out_p[:, :, :H]           # drop lane padding (one XLA slice outside the kernel)


def attention_head_ref(x, wk, bk, wq, bq, wv, bv):
    """Pure-JAX f32 reference mirroring the PyTorch forward (dropout = identity)."""
    K = x @ wk + bk
    Q = x @ wq + bq
    V = x @ wv + bv
    scores = jnp.einsum("btd,bsd->bts", Q, K)
    T = scores.shape[1]
    tril = jnp.tril(jnp.ones((T, T), dtype=bool))
    wei = jnp.where(tril[None], scores, 0.0)
    wei = jnp.where(wei == 0.0, -jnp.inf, wei)
    norm_wei = jax.nn.softmax(wei, axis=-1)
    return jnp.einsum("bts,bsh->bth", norm_wei, V)


if __name__ == "__main__":
    B, T, C, H = 2, 8, 32, 16  # batch, seq, input_dim, head_dim

    key = jax.random.PRNGKey(0)
    kx, k1, k2, k3, k4, k5, k6 = jax.random.split(key, 7)

    x = jax.random.normal(kx, (B, T, C), dtype=jnp.float32)

    # Deterministic parameter init (torch Linear: weight (H, C), bias (H,)),
    # stored pre-transposed as (C, H) for the kernel.
    scale = 1.0 / jnp.sqrt(jnp.float32(C))
    wk = jax.random.uniform(k1, (C, H), jnp.float32, -scale, scale)
    bk = jax.random.uniform(k2, (1, H), jnp.float32, -scale, scale)
    wq = jax.random.uniform(k3, (C, H), jnp.float32, -scale, scale)
    bq = jax.random.uniform(k4, (1, H), jnp.float32, -scale, scale)
    wv = jax.random.uniform(k5, (C, H), jnp.float32, -scale, scale)
    bv = jax.random.uniform(k6, (1, H), jnp.float32, -scale, scale)

    out = attention_head(x, wk, bk, wq, bq, wv, bv)
    out = jax.block_until_ready(out)

    ref = attention_head_ref(x, wk, bk, wq, bq, wv, bv)
    assert out.shape == (B, T, H)
    # Tolerance accounts for bf16 MXU operands (f32 accumulation) and the approx (EUP)
    # reciprocal in the softmax denominator, compared against an exact-f32 reference.
    assert jnp.allclose(out, ref, atol=5e-2, rtol=5e-2), "Pallas output mismatch vs reference"

    print("KERNEL_OK")
</pallas_src>

<mosaic_0001>
module attributes {stable_mosaic.version = 11 : i64} {
  func.func @attention_head_kernel(%arg0: i32, %arg1: memref<8x128xf32, #tpu.memory_space<vmem>>, %arg2: memref<128x384xbf16, #tpu.memory_space<vmem>>, %arg3: memref<1x384xf32, #tpu.memory_space<vmem>>, %arg4: memref<1x8x128xf32, #tpu.memory_space<vmem>>) attributes {dimension_semantics = [#tpu.dimension_semantics<parallel>], iteration_bounds = array<i64: 2>, scalar_prefetch = 0 : i64, scratch_operands = 0 : i64, tpu.core_type = #tpu.core_type<tc>, window_params = [{transform_indices = @transform_0, window_bounds = array<i64: 8, 128>}, {pipeline_mode = #tpu.pipeline_mode<synchronous>, transform_indices = @transform_1, window_bounds = array<i64: 128, 384>}, {pipeline_mode = #tpu.pipeline_mode<synchronous>, transform_indices = @transform_2, window_bounds = array<i64: 1, 384>}, {transform_indices = @transform_3, window_bounds = array<i64: 1, 8, 128>}]} {
    %c0 = arith.constant 0 : index
    %c0_0 = arith.constant 0 : index
    %0 = vector.load %arg1[%c0, %c0_0] : memref<8x128xf32, #tpu.memory_space<vmem>>, vector<8x128xf32>
    %1 = arith.truncf %0 : vector<8x128xf32> to vector<8x128xbf16>
    %c0_1 = arith.constant 0 : index
    %c0_2 = arith.constant 0 : index
    %2 = vector.load %arg2[%c0_1, %c0_2] : memref<128x384xbf16, #tpu.memory_space<vmem>>, vector<128x384xbf16>
    %cst = arith.constant dense<0.000000e+00> : vector<8x384xf32>
    %3 = tpu.matmul %1, %2, %cst {dimension_numbers = #tpu.dot_dimension_numbers<[1], [0], [0], [1], [0, 0, 1, 1], [], []>} : vector<8x128xbf16>, vector<128x384xbf16>, vector<8x384xf32> -> vector<8x384xf32>
    %c0_3 = arith.constant 0 : index
    %c0_4 = arith.constant 0 : index
    %4 = vector.load %arg3[%c0_3, %c0_4] : memref<1x384xf32, #tpu.memory_space<vmem>>, vector<1x384xf32>
    %5 = vector.broadcast %4 : vector<1x384xf32> to vector<8x384xf32>
    %6 = arith.addf %3, %5 : vector<8x384xf32>
    %7 = vector.shape_cast %6 : vector<8x384xf32> to vector<1x8x384xf32>
    %8 = vector.extract_strided_slice %7 {offsets = [0, 0, 0], sizes = [1, 8, 128], strides = [1, 1, 1]} : vector<1x8x384xf32> to vector<1x8x128xf32>
    %9 = vector.extract_strided_slice %7 {offsets = [0, 0, 128], sizes = [1, 8, 128], strides = [1, 1, 1]} : vector<1x8x384xf32> to vector<1x8x128xf32>
    %10 = vector.extract_strided_slice %7 {offsets = [0, 0, 256], sizes = [1, 8, 128], strides = [1, 1, 1]} : vector<1x8x384xf32> to vector<1x8x128xf32>
    %11 = arith.truncf %9 : vector<1x8x128xf32> to vector<1x8x128xbf16>
    %12 = arith.truncf %8 : vector<1x8x128xf32> to vector<1x8x128xbf16>
    %cst_5 = arith.constant dense<0.000000e+00> : vector<1x8x8xf32>
    %13 = tpu.matmul %11, %12, %cst_5 {dimension_numbers = #tpu.dot_dimension_numbers<[2], [2], [1], [1], [0, 0, 0, 1, 1, 1], [0], [0]>} : vector<1x8x128xbf16>, vector<1x8x128xbf16>, vector<1x8x8xf32> -> vector<1x8x8xf32>
    %14 = tpu.iota {dimensions = array<i32: 0>} : vector<8x8xi32>
    %15 = tpu.iota {dimensions = array<i32: 1>} : vector<8x8xi32>
    %16 = arith.cmpi sle, %15, %14 : vector<8x8xi32>
    %17 = vector.shape_cast %16 : vector<8x8xi1> to vector<1x8x8xi1>
    %cst_6 = arith.constant 0.000000e+00 : f32
    %18 = vector.broadcast %cst_6 : f32 to vector<1x8x8xf32>
    %19 = arith.cmpf one, %13, %18 : vector<1x8x8xf32>
    %20 = arith.andi %17, %19 : vector<1x8x8xi1>
    %cst_7 = arith.constant 0xFF800000 : f32
    %21 = vector.broadcast %cst_7 : f32 to vector<1x8x8xf32>
    %22 = arith.select %20, %13, %21 : vector<1x8x8xi1>, vector<1x8x8xf32>
    %cst_8 = arith.constant dense<0xFF800000> : vector<1x8xf32>
    %23 = vector.multi_reduction <maximumf>, %22, %cst_8 [2] : vector<1x8x8xf32> to vector<1x8xf32>
    %24 = vector.shape_cast %23 : vector<1x8xf32> to vector<1x8x1xf32>
    %25 = vector.broadcast %24 : vector<1x8x1xf32> to vector<1x8x8xf32>
    %26 = arith.subf %22, %25 : vector<1x8x8xf32>
    %27 = math.exp %26 : vector<1x8x8xf32>
    %cst_9 = arith.constant dense<0.000000e+00> : vector<1x8xf32>
    %28 = vector.multi_reduction <add>, %27, %cst_9 [2] : vector<1x8x8xf32> to vector<1x8xf32>
    %29 = vector.shape_cast %28 : vector<1x8xf32> to vector<1x8x1xf32>
    %30 = tpu.reciprocal %29 {approx = true} : vector<1x8x1xf32> -> vector<1x8x1xf32>
    %31 = vector.broadcast %30 : vector<1x8x1xf32> to vector<1x8x8xf32>
    %32 = arith.mulf %27, %31 : vector<1x8x8xf32>
    %33 = arith.truncf %32 : vector<1x8x8xf32> to vector<1x8x8xbf16>
    %34 = arith.truncf %10 : vector<1x8x128xf32> to vector<1x8x128xbf16>
    %cst_10 = arith.constant dense<0.000000e+00> : vector<1x8x128xf32>
    %35 = tpu.matmul %33, %34, %cst_10 {dimension_numbers = #tpu.dot_dimension_numbers<[2], [1], [1], [2], [0, 0, 0, 1, 1, 2], [0], [0]>} : vector<1x8x8xbf16>, vector<1x8x128xbf16>, vector<1x8x128xf32> -> vector<1x8x128xf32>
    %c0_11 = arith.constant 0 : index
    %c0_12 = arith.constant 0 : index
    %c0_13 = arith.constant 0 : index
    %36 = vector.load %arg4[%c0_11, %c0_12, %c0_13] : memref<1x8x128xf32, #tpu.memory_space<vmem>>, vector<1x8x128xf32>
    tpu.vector_store %arg4[%c0_11, %c0_12, %c0_13], %35 {strides = array<i32>} : memref<1x8x128xf32, #tpu.memory_space<vmem>>, vector<1x8x128xf32>,
    return
  }
  func.func @transform_0(%arg0: i32) -> (i32, i32) {
    %c0_i32 = arith.constant 0 : i32
    %c0_i32_0 = arith.constant 0 : i32
    return %arg0, %c0_i32 : i32, i32
  }
  func.func @transform_1(%arg0: i32) -> (i32, i32) {
    %c0_i32 = arith.constant 0 : i32
    %c0_i32_0 = arith.constant 0 : i32
    %c0_i32_1 = arith.constant 0 : i32
    return %c0_i32, %c0_i32_0 : i32, i32
  }
  func.func @transform_2(%arg0: i32) -> (i32, i32) {
    %c0_i32 = arith.constant 0 : i32
    %c0_i32_0 = arith.constant 0 : i32
    %c0_i32_1 = arith.constant 0 : i32
    return %c0_i32, %c0_i32_0 : i32, i32
  }
  func.func @transform_3(%arg0: i32) -> (i32, i32, i32) {
    %c0_i32 = arith.constant 0 : i32
    %c0_i32_0 = arith.constant 0 : i32
    %c0_i32_1 = arith.constant 0 : i32
    return %arg0, %c0_i32, %c0_i32_0 : i32, i32, i32
  }
}

</mosaic_0001>

<llo_original>
// kernel: tpu_custom_call.1
$region0: #{tpu_custom_call.1}
  #allocation0 [shape = 'u32[]', space=smem, size = 0x4, offset = 0x4, fixed_abs, tag = 'smem constant byte address 0x4 - core index']
  #allocation1 [shape = 'u32[144,128]{1,0:T(1,128)}', space=vmem, size = 0x12000, scoped, tag = 'internal scratch']
  %s0 = inlined_call_operand.hbm [shape: f32[16,128], index: 0, kind: input, shape index: {}]
  %s1 = inlined_call_operand.hbm [shape: bf16[128,384], index: 1, kind: input, shape index: {}]
  %s2 = inlined_call_operand.vmem [shape: f32[1,384], index: 2, kind: input, shape index: {}]
  %s3 = inlined_call_operand.hbm [shape: f32[2,8,128], index: 3, kind: output, shape index: {}]
  %s4 = sld [smem:[#allocation0]]
  $region53: #{tpu_custom_call.1} parent=0
    _
  %s6 = ssub.s32 1, %s4
  %s7 = scalar_select 0, %s6, %s4
  $region1: #{tpu_custom_call.1} parent=0
    #allocation2 [shape = 'u8[8192]{0}', space=vmem, size = 0x2000, scoped, tag = 'input window, operand 0']
    #allocation3 [shape = 's32[2]{0}', space=sflag, size = 0x8, scoped, tag = 'scoped memory for tpu_custom_call.1']
    #allocation4 [shape = 's32[2]{0}', space=sflag, size = 0x8, scoped, tag = 'scoped memory for tpu_custom_call.1']
    #allocation5 [shape = 'u8[98304]{0}', space=vmem, size = 0x18000, scoped, tag = 'input window, operand 1, single buffered']
    #allocation6 [shape = 's32[1]{0}', space=sflag, size = 0x4, scoped, tag = 'scoped memory for tpu_custom_call.1']
    #allocation7 [shape = 'u8[8192]{0}', space=vmem, size = 0x2000, scoped, tag = 'output window, operand 0']
    %8 = vsyncpa [#allocation3], 0
    %s9 = scalar_lea.sflag [#allocation3], 1
    %10 = vsyncpa %s9, 0
    %11 = vsyncpa [#allocation6], 0
    %12 = vsyncpa [#allocation4], 0
    %s13 = scalar_lea.sflag [#allocation4], 1
    %14 = vsyncpa %s13, 0
    loop: start=0, step=1, limit=4
    $region2: #{tpu_custom_call.1} parent=1 // loop_pre_header
      _
    $region3: #{tpu_custom_call.1} parent=1 // loop_header
      %s16 = sphi 0, %s20
      %p17 = scmp.ge.s32.totalorder %s16, 4
      %s26 = sphi 0, %s28
      %s29 = sphi 0, %s26
      %s30 = sphi 0, %s29
      %s46 = sphi 0, %s30
      %s50 = sphi 0, %s50
      %s52 = sphi 0, %s50
      %s53 = sphi 0, %s52
      %s67 = sphi 0, %s53
      %s71 = sphi 0, %s71
      %s73 = sphi 0, %s71
      %s74 = sphi 0, %s73
      %s88 = sphi 0, %s74
      %s94 = sphi 0, %s96
      %s97 = sphi 0, %s94
      %s98 = sphi 0, %s97
      %s114 = sphi 0, %s98
    $region4: #{tpu_custom_call.1} parent=1 // loop_header_branch
      %19 = sbr.rel (%p17) target = $region8
    $region5: #{tpu_custom_call.1} parent=1 // loop_body
      %s21 = ssub.s32 %s16, 1
      %s22 = ssub.s32 %s16, 2
      %s23 = sadd.s32 %s16, 1
      %s24 = ssub.s32 %s16, %s23
      %p25 = scmp.eq.s32.totalorder %s24, 0
      %s27 = sadd.s32 %s26, 1
      %s28 = scalar_select %p25, %s26, %s27
      %p31 = pneg %p25
      %p32 = scmp.eq.s32.totalorder %s16, 1
      %p33 = por %p31, %p32
      %p34 = scmp.ne.s32.totalorder %s26, %s29
      %p35 = scmp.eq.s32.totalorder %s16, 0
      %p36 = por %p34, %p35
      %p37 = scmp.ne.s32.totalorder %s26, %s29
      %p38 = scmp.eq.s32.totalorder %s21, 1
      %p39 = por %p37, %p38
      %p40 = scmp.ne.s32.totalorder %s29, %s30
      %p41 = scmp.eq.s32.totalorder %s21, 0
      %p42 = por %p40, %p41
      %p43 = scmp.ne.s32.totalorder %s29, %s30
      %p44 = scmp.eq.s32.totalorder %s22, 1
      %p45 = por %p43, %p44
      %p47 = scmp.ne.s32.totalorder %s30, %s46
      %p48 = scmp.eq.s32.totalorder %s22, 0
      %p49 = por %p47, %p48
      %s51 = sadd.s32 %s50, 1
      %p54 = scmp.eq.s32.totalorder %s16, 1
      %p55 = scmp.ne.s32.totalorder %s50, %s52
      %p56 = scmp.eq.s32.totalorder %s16, 0
      %p57 = por %p55, %p56
      %p58 = scmp.ne.s32.totalorder %s50, %s52
      %p59 = scmp.eq.s32.totalorder %s21, 1
      %p60 = por %p58, %p59
      %p61 = scmp.ne.s32.totalorder %s52, %s53
      %p62 = scmp.eq.s32.totalorder %s21, 0
      %p63 = por %p61, %p62
      %p64 = scmp.ne.s32.totalorder %s52, %s53
      %p65 = scmp.eq.s32.totalorder %s22, 1
      %p66 = por %p64, %p65
      %p68 = scmp.ne.s32.totalorder %s53, %s67
      %p69 = scmp.eq.s32.totalorder %s22, 0
      %p70 = por %p68, %p69
      %s72 = sadd.s32 %s71, 1
      %p75 = scmp.eq.s32.totalorder %s16, 1
      %p76 = scmp.ne.s32.totalorder %s71, %s73
      %p77 = scmp.eq.s32.totalorder %s16, 0
      %p78 = por %p76, %p77
      %p79 = scmp.ne.s32.totalorder %s71, %s73
      %p80 = scmp.eq.s32.totalorder %s21, 1
      %p81 = por %p79, %p80
      %p82 = scmp.ne.s32.totalorder %s73, %s74
      %p83 = scmp.eq.s32.totalorder %s21, 0
      %p84 = por %p82, %p83
      %p85 = scmp.ne.s32.totalorder %s73, %s74
      %p86 = scmp.eq.s32.totalorder %s22, 1
      %p87 = por %p85, %p86
      %p89 = scmp.ne.s32.totalorder %s74, %s88
      %p90 = scmp.eq.s32.totalorder %s22, 0
      %p91 = por %p89, %p90
      %s92 = ssub.s32 %s16, %s23
      %p93 = scmp.eq.s32.totalorder %s92, 0
      %s95 = sadd.s32 %s94, 1
      %s96 = scalar_select %p93, %s94, %s95
      %p99 = pneg %p93
      %p100 = scmp.eq.s32.totalorder %s16, 1
      %p101 = por %p99, %p100
      %p102 = scmp.ne.s32.totalorder %s94, %s97
      %p103 = scmp.eq.s32.totalorder %s16, 0
      %p104 = por %p102, %p103
      %p105 = scmp.ne.s32.totalorder %s94, %s97
      %p106 = scmp.eq.s32.totalorder %s21, 1
      %p107 = por %p105, %p106
      %p108 = scmp.ne.s32.totalorder %s97, %s98
      %p109 = scmp.eq.s32.totalorder %s21, 0
      %p110 = por %p108, %p109
      %p111 = scmp.ne.s32.totalorder %s97, %s98
      %p112 = scmp.eq.s32.totalorder %s22, 1
      %p113 = por %p111, %p112
      %p115 = scmp.ne.s32.totalorder %s98, %s114
      %p116 = scmp.eq.s32.totalorder %s22, 0
      %p117 = por %p115, %p116
      %p118 = scmp.le.s32.totalorder 1, %s16
      %p119 = scmp.lt.s32.totalorder %s16, 3
      %p120 = pnand %p118, %p119
      %p121 = pneg %p120
      // Predicated region
      $region9: #{tpu_custom_call.1} parent=5 // pred_check
        _
      $region10: #{tpu_custom_call.1} parent=5 // pred_check_branch
        %123 = sbr.rel (%p120) target = $region12
      $region11: #{tpu_custom_call.1} parent=5 // pred_region
        %s124 = ssub.s32 %s16, 1
        // Predicated region
        $region13: #{tpu_custom_call.1} parent=11 // pred_check
          %p125 = pneg %p63
        $region14: #{tpu_custom_call.1} parent=11 // pred_check_branch
          %127 = sbr.rel (%p125) target = $region16
        $region15: #{tpu_custom_call.1} parent=11 // pred_region
          %s129 = ssub.s32 3072, 3072
          %130 = vsyncadd [#allocation6], %s129
          %s131 = sshll.u32 [#allocation5], 4
          %s132 = int_to_ptr.vmem [resolvable:$true] %s131
          %137 = dma.hbm_to_vmem [thread:$0]  %s1, 3072, %s132, [#allocation6], 192, 192, 12
        $region16: #{tpu_custom_call.1} parent=11 // pred_fallthru
          _
        // Predicated region
        $region17: #{tpu_custom_call.1} parent=11 // pred_check
          %p138 = pneg %p84
        $region18: #{tpu_custom_call.1} parent=11 // pred_check_branch
          %140 = sbr.rel (%p138) target = $region20
        $region19: #{tpu_custom_call.1} parent=11 // pred_region
          _
        $region20: #{tpu_custom_call.1} parent=11 // pred_fallthru
          _
      $region12: #{tpu_custom_call.1} parent=5 // pred_fallthru
        _
      %p141 = scmp.lt.s32.totalorder %s16, 2
      // Predicated region
      $region21: #{tpu_custom_call.1} parent=5 // pred_check
        %p142 = pneg %p141
      $region22: #{tpu_custom_call.1} parent=5 // pred_check_branch
        %144 = sbr.rel (%p142) target = $region24
      $region23: #{tpu_custom_call.1} parent=5 // pred_region
        // Predicated region
        $region25: #{tpu_custom_call.1} parent=23 // pred_check
          %p145 = pneg %p36
        $region26: #{tpu_custom_call.1} parent=23 // pred_check_branch
          %147 = sbr.rel (%p145) target = $region28
        $region27: #{tpu_custom_call.1} parent=23 // pred_region
          %s148 = sand.u32 %s26, 1
          %s149 = scalar_lea.sflag [#allocation3], %s148
          %s150 = sand.u32 %s26, 1
          %s151 = smul.addr %s150, 8
          %s152 = scalar_lea.vmem [#allocation2], %s151
          %s154 = ssub.s32 128, 128
          %155 = vsyncadd %s149, %s154
          %s156 = smul.addr %s16, 128
          %s157 = scalar_lea.hbm %s0, %s156
          %s159 = sshll.u32 %s152, 4
          %s160 = int_to_ptr.vmem [resolvable:$true] %s159
          %162 = dma.hbm_to_vmem [thread:$0]  %s157, 128, %s160, %s149
        $region28: #{tpu_custom_call.1} parent=23 // pred_fallthru
          _
      $region24: #{tpu_custom_call.1} parent=5 // pred_fallthru
        _
      %p163 = scmp.le.s32.totalorder 1, %s16
      %p164 = scmp.lt.s32.totalorder %s16, 3
      %p165 = pnand %p163, %p164
      %p166 = pneg %p165
      // Predicated region
      $region29: #{tpu_custom_call.1} parent=5 // pred_check
        _
      $region30: #{tpu_custom_call.1} parent=5 // pred_check_branch
        %168 = sbr.rel (%p165) target = $region32
      $region31: #{tpu_custom_call.1} parent=5 // pred_region
        %s169 = ssub.s32 %s16, 1
        %s170 = sand.u32 %s29, 1
        %s171 = scalar_lea.sflag [#allocation3], %s170
        %s172 = sand.u32 %s29, 1
        %s173 = smul.addr %s172, 8
        %s174 = scalar_lea.vmem [#allocation2], %s173
        // Predicated region
        $region33: #{tpu_custom_call.1} parent=31 // pred_check
          %p175 = pneg %p42
        $region34: #{tpu_custom_call.1} parent=31 // pred_check_branch
          %177 = sbr.rel (%p175) target = $region36
        $region35: #{tpu_custom_call.1} parent=31 // pred_region
          %178 = dma.done %s171, 128
        $region36: #{tpu_custom_call.1} parent=31 // pred_fallthru
          _
        // Predicated region
        $region37: #{tpu_custom_call.1} parent=31 // pred_check
          %p179 = pneg %p63
        $region38: #{tpu_custom_call.1} parent=31 // pred_check_branch
          %181 = sbr.rel (%p179) target = $region40
        $region39: #{tpu_custom_call.1} parent=31 // pred_region
          %182 = dma.done [#allocation6], 3072
        $region40: #{tpu_custom_call.1} parent=31 // pred_fallthru
          _
        %s183 = sand.u32 %s29, 1
        %s184 = scalar_lea.sflag [#allocation3], %s183
        %s185 = sand.u32 %s29, 1
        %s186 = smul.addr %s185, 8
        %s187 = scalar_lea.vmem [#allocation2], %s186
        %p188 = pneg %p42
        %p189 = pneg %p39
        %p190 = pneg %p63
        %p191 = pneg %p60
        %p192 = pneg %p84
        %p193 = pneg %p81
        %p194 = pneg %p110
        %p195 = pneg %p107
        %s196 = sand.u32 %s97, 1
        %s197 = scalar_lea.sflag [#allocation4], %s196
        %s198 = sand.u32 %s97, 1
        %s199 = smul.addr %s198, 8
        %s200 = scalar_lea.vmem [#allocation7], %s199
        %v202 = vld [vmem:[%s174] sm:$0xff]
        %v203 = vpack.c.bf16 %v202, %v202
        %v204 = vld [vmem:[#allocation5] sm:$0xff]
        %v205 = vld [vmem:[#allocation5 + $0x8] sm:$0xf]
        %v206 = vld [vmem:[#allocation5 + $0xc] sm:$0xff]
        %v207 = vld [vmem:[#allocation5 + $0x14] sm:$0xf]
        %v208 = vld [vmem:[#allocation5 + $0x18] sm:$0xff]
        %v209 = vld [vmem:[#allocation5 + $0x20] sm:$0xf]
        %v210 = vld [vmem:[#allocation5 + $0x24] sm:$0xff]
        %v211 = vld [vmem:[#allocation5 + $0x2c] sm:$0xf]
        %v212 = vld [vmem:[#allocation5 + $0x30] sm:$0xff]
        %v213 = vld [vmem:[#allocation5 + $0x38] sm:$0xf]
        %v214 = vld [vmem:[#allocation5 + $0x3c] sm:$0xff]
        %v215 = vld [vmem:[#allocation5 + $0x44] sm:$0xf]
        %v216 = vld [vmem:[#allocation5 + $0x48] sm:$0xff]
        %v217 = vld [vmem:[#allocation5 + $0x50] sm:$0xf]
        %v218 = vld [vmem:[#allocation5 + $0x54] sm:$0xff]
        %v219 = vld [vmem:[#allocation5 + $0x5c] sm:$0xf]
        %v220 = vld [vmem:[#allocation5 + $0x60] sm:$0xff]
        %v221 = vld [vmem:[#allocation5 + $0x68] sm:$0xf]
        %v222 = vld [vmem:[#allocation5 + $0x6c] sm:$0xff]
        %v223 = vld [vmem:[#allocation5 + $0x74] sm:$0xf]
        %v224 = vld [vmem:[#allocation5 + $0x78] sm:$0xff]
        %v225 = vld [vmem:[#allocation5 + $0x80] sm:$0xf]
        %v226 = vld [vmem:[#allocation5 + $0x84] sm:$0xff]
        %v227 = vld [vmem:[#allocation5 + $0x8c] sm:$0xf]
        %v228 = vld [vmem:[#allocation5 + $0x90] sm:$0xff]
        %v229 = vld [vmem:[#allocation5 + $0x98] sm:$0xf]
        %v230 = vld [vmem:[#allocation5 + $0x9c] sm:$0xff]
        %v231 = vld [vmem:[#allocation5 + $0xa4] sm:$0xf]
        %v232 = vld [vmem:[#allocation5 + $0xa8] sm:$0xff]
        %v233 = vld [vmem:[#allocation5 + $0xb0] sm:$0xf]
        %v234 = vld [vmem:[#allocation5 + $0xb4] sm:$0xff]
        %v235 = vld [vmem:[#allocation5 + $0xbc] sm:$0xf]
        %v236 = vld [vmem:[%s2] sm:$0x7]
        %v238 = vlaneseq
        %v239 = vshrl.u32 %v238, 7
        %v240 = vsub.s32 0, %v239
        %v241 = vrot.slane %v236, %v240
        %v242 = vlaneseq
        %v243 = vshrl.u32 %v242, 7
        %v244 = vsub.s32 1, %v243
        %v245 = vrot.slane %v236, %v244
        %v246 = vlaneseq
        %v247 = vshrl.u32 %v246, 7
        %v248 = vsub.s32 2, %v247
        %v249 = vrot.slane %v236, %v248
        %v285 = vunpack.c.l.b16 %v204
        %v286 = vunpack.c.h.b16 %v204
        %v287 = vunpack.c.l.b16 %v205
        %v288 = vunpack.c.l.b16 %v206
        %v289 = vunpack.c.h.b16 %v206
        %v290 = vunpack.c.l.b16 %v207
        %v291 = vunpack.c.l.b16 %v208
        %v292 = vunpack.c.h.b16 %v208
        %v293 = vunpack.c.l.b16 %v209
        %v294 = vunpack.c.l.b16 %v210
        %v295 = vunpack.c.h.b16 %v210
        %v296 = vunpack.c.l.b16 %v211
        %v297 = vunpack.c.l.b16 %v212
        %v298 = vunpack.c.h.b16 %v212
        %v299 = vunpack.c.l.b16 %v213
        %v300 = vunpack.c.l.b16 %v214
        %v301 = vunpack.c.h.b16 %v214
        %v302 = vunpack.c.l.b16 %v215
        %v303 = vunpack.c.l.b16 %v216
        %v304 = vunpack.c.h.b16 %v216
        %v305 = vunpack.c.l.b16 %v217
        %v306 = vunpack.c.l.b16 %v218
        %v307 = vunpack.c.h.b16 %v218
        %v308 = vunpack.c.l.b16 %v219
        %v309 = vunpack.c.l.b16 %v220
        %v310 = vunpack.c.h.b16 %v220
        %v311 = vunpack.c.l.b16 %v221
        %v312 = vunpack.c.l.b16 %v222
        %v313 = vunpack.c.h.b16 %v222
        %v314 = vunpack.c.l.b16 %v223
        %v315 = vunpack.c.l.b16 %v224
        %v316 = vunpack.c.h.b16 %v224
        %v317 = vunpack.c.l.b16 %v225
        %v318 = vunpack.c.l.b16 %v226
        %v319 = vunpack.c.h.b16 %v226
        %v320 = vunpack.c.l.b16 %v227
        %v321 = vunpack.c.l.b16 %v228
        %v322 = vunpack.c.h.b16 %v228
        %v323 = vunpack.c.l.b16 %v229
        %v324 = vunpack.c.l.b16 %v230
        %v325 = vunpack.c.h.b16 %v230
        %v326 = vunpack.c.l.b16 %v231
        %v327 = vunpack.c.l.b16 %v232
        %v328 = vunpack.c.h.b16 %v232
        %v329 = vunpack.c.l.b16 %v233
        %v330 = vunpack.c.l.b16 %v234
        %v331 = vunpack.c.h.b16 %v234
        %v332 = vunpack.c.l.b16 %v235
        %v333 = vpack.c.b16 %v288, %v285
        %v334 = vpack.c.b16 %v289, %v286
        %v335 = vpack.c.b16 %v290, %v287
        %v336 = vpack.c.b16 %v294, %v291
        %v337 = vpack.c.b16 %v295, %v292
        %v338 = vpack.c.b16 %v296, %v293
        %v339 = vpack.c.b16 %v300, %v297
        %v340 = vpack.c.b16 %v301, %v298
        %v341 = vpack.c.b16 %v302, %v299
        %v342 = vpack.c.b16 %v306, %v303
        %v343 = vpack.c.b16 %v307, %v304
        %v344 = vpack.c.b16 %v308, %v305
        %v345 = vpack.c.b16 %v312, %v309
        %v346 = vpack.c.b16 %v313, %v310
        %v347 = vpack.c.b16 %v314, %v311
        %v348 = vpack.c.b16 %v318, %v315
        %v349 = vpack.c.b16 %v319, %v316
        %v350 = vpack.c.b16 %v320, %v317
        %v351 = vpack.c.b16 %v324, %v321
        %v352 = vpack.c.b16 %v325, %v322
        %v353 = vpack.c.b16 %v326, %v323
        %v354 = vpack.c.b16 %v330, %v327
        %v355 = vpack.c.b16 %v331, %v328
        %v356 = vpack.c.b16 %v332, %v329
        %381 = vmatprep.subr.bf16.mxu0 %v334
        %382 = vmatpush1.bf16.msra.mxu0 %v333
        %383 = vmatprep.subr.bf16.mxu0 %v337
        %384 = vmatpush1.bf16.msra.mxu0 %v336
        %385 = vmatprep.subr.bf16.mxu0 %v340
        %386 = vmatpush1.bf16.msra.mxu0 %v339
        %387 = vmatprep.subr.bf16.mxu0 %v343
        %388 = vmatpush1.bf16.msra.mxu0 %v342
        %389 = vmatprep.subr.bf16.mxu0 %v346
        %390 = vmatpush1.bf16.msra.mxu0 %v345
        %391 = vmatprep.subr.bf16.mxu0 %v349
        %392 = vmatpush1.bf16.msra.mxu0 %v348
        %393 = vmatprep.subr.bf16.mxu0 %v352
        %394 = vmatpush1.bf16.msra.mxu0 %v351
        %395 = vmatprep.subr.bf16.mxu0 %v355
        %396 = vmatpush1.bf16.msra.mxu0 %v354
        %397 = vmatprep.subr.bf16.mxu0 0
        %398 = vmatpush1.bf16.msra.mxu0 0
        %399 = vmatprep.subr.bf16.mxu0 0
        %400 = vmatpush1.bf16.msra.mxu0 0
        %401 = vmatprep.subr.bf16.mxu0 0
        %402 = vmatpush1.bf16.msra.mxu0 0
        %403 = vmatprep.subr.bf16.mxu0 0
        %404 = vmatpush1.bf16.msra.mxu0 0
        %405 = vmatprep.subr.bf16.mxu0 0
        %406 = vmatpush1.bf16.msra.mxu0 0
        %407 = vmatprep.subr.bf16.mxu0 0
        %408 = vmatpush1.bf16.msra.mxu0 0
        %409 = vmatprep.subr.bf16.mxu0 0
        %410 = vmatpush1.bf16.msra.mxu0 0
        %411 = vmatprep.subr.bf16.mxu0 0
        %412 = vmatpush1.bf16.msra.mxu0 0
        %413 = vmatprep.mubr.bf16.mxu0 0
        %414 = vmatmul.mubr.bf16.gmra.mrb[0].mxu0 %v203
        %v415 = vpop.f32.mrb[0].mxu0
        %v416 = vadd.f32 %v241, %v415
        %v417 = vpop.f32.mrb[0].mxu0
        %v418 = vadd.f32 %v245, %v417
        %v419 = vpop.f32.mrb[0].mxu0
        %v420 = vpop.f32.mrb[0].mxu0
        %421 = vdwg.mxu0
        %422 = vmatprep.subr.bf16.mxu0 0
        %423 = vmatpush1.bf16.msra.mxu0 %v335
        %424 = vmatprep.subr.bf16.mxu0 0
        %425 = vmatpush1.bf16.msra.mxu0 %v338
        %426 = vmatprep.subr.bf16.mxu0 0
        %427 = vmatpush1.bf16.msra.mxu0 %v341
        %428 = vmatprep.subr.bf16.mxu0 0
        %429 = vmatpush1.bf16.msra.mxu0 %v344
        %430 = vmatprep.subr.bf16.mxu0 0
        %431 = vmatpush1.bf16.msra.mxu0 %v347
        %432 = vmatprep.subr.bf16.mxu0 0
        %433 = vmatpush1.bf16.msra.mxu0 %v350
        %434 = vmatprep.subr.bf16.mxu0 0
        %435 = vmatpush1.bf16.msra.mxu0 %v353
        %436 = vmatprep.subr.bf16.mxu0 0
        %437 = vmatpush1.bf16.msra.mxu0 %v356
        %438 = vmatprep.subr.bf16.mxu0 0
        %439 = vmatpush1.bf16.msra.mxu0 0
        %440 = vmatprep.subr.bf16.mxu0 0
        %441 = vmatpush1.bf16.msra.mxu0 0
        %442 = vmatprep.subr.bf16.mxu0 0
        %443 = vmatpush1.bf16.msra.mxu0 0
        %444 = vmatprep.subr.bf16.mxu0 0
        %445 = vmatpush1.bf16.msra.mxu0 0
        %446 = vmatprep.subr.bf16.mxu0 0
        %447 = vmatpush1.bf16.msra.mxu0 0
        %448 = vmatprep.subr.bf16.mxu0 0
        %449 = vmatpush1.bf16.msra.mxu0 0
        %450 = vmatprep.subr.bf16.mxu0 0
        %451 = vmatpush1.bf16.msra.mxu0 0
        %452 = vmatprep.subr.bf16.mxu0 0
        %453 = vmatpush1.bf16.msra.mxu0 0
        %454 = vmatprep.mubr.bf16.mxu0 0
        %455 = vmatmul.mubr.bf16.gmra.mrb[0].mxu0 %v203
        %v456 = vpop.f32.mrb[0].mxu0
        %v457 = vadd.f32 %v249, %v456
        %v458 = vpop.f32.mrb[0].mxu0
        %v459 = vpop.f32.mrb[0].mxu0
        %v460 = vpop.f32.mrb[0].mxu0
        %461 = vdwg.mxu0
        %v462 = vpack.c.bf16 %v418, %v418
        %v463 = vpack.c.bf16 %v416, %v416
        %464 = vmatprep.subr.bf16.mxu0 0
        %465 = vmatpush1.bf16.xpose.msra.mxu0 %v463
        %466 = vmatprep.subr.bf16.mxu0 0
        %467 = vmatpush1.bf16.xpose.msra.mxu0 0
        %468 = vmatprep.subr.bf16.mxu0 0
        %469 = vmatpush1.bf16.xpose.msra.mxu0 0
        %470 = vmatprep.subr.bf16.mxu0 0
        %471 = vmatpush1.bf16.xpose.msra.mxu0 0
        %472 = vmatprep.subr.bf16.mxu0 0
        %473 = vmatpush1.bf16.xpose.msra.mxu0 0
        %474 = vmatprep.subr.bf16.mxu0 0
        %475 = vmatpush1.bf16.xpose.msra.mxu0 0
        %476 = vmatprep.subr.bf16.mxu0 0
        %477 = vmatpush1.bf16.xpose.msra.mxu0 0
        %478 = vmatprep.subr.bf16.mxu0 0
        %479 = vmatpush1.bf16.xpose.msra.mxu0 0
        %480 = vmatprep.subr.bf16.mxu0 0
        %481 = vmatpush1.bf16.xpose.msra.mxu0 0
        %482 = vmatprep.subr.bf16.mxu0 0
        %483 = vmatpush1.bf16.xpose.msra.mxu0 0
        %484 = vmatprep.subr.bf16.mxu0 0
        %485 = vmatpush1.bf16.xpose.msra.mxu0 0
        %486 = vmatprep.subr.bf16.mxu0 0
        %487 = vmatpush1.bf16.xpose.msra.mxu0 0
        %488 = vmatprep.subr.bf16.mxu0 0
        %489 = vmatpush1.bf16.xpose.msra.mxu0 0
        %490 = vmatprep.subr.bf16.mxu0 0
        %491 = vmatpush1.bf16.xpose.msra.mxu0 0
        %492 = vmatprep.subr.bf16.mxu0 0
        %493 = vmatpush1.bf16.xpose.msra.mxu0 0
        %494 = vmatprep.subr.bf16.mxu0 0
        %495 = vmatpush1.bf16.xpose.msra.mxu0 0
        %496 = vmatprep.mubr.bf16.mxu0 0
        %497 = vmatmul.mubr.bf16.gmra.mrb[0].mxu0 %v462
        %v498 = vpop.f32.mrb[0].mxu0
        %v499 = vadd.f32 0.0, %v498
        %v500 = vpop.f32.mrb[0].mxu0
        %v501 = vpop.f32.mrb[0].mxu0
        %v502 = vpop.f32.mrb[0].mxu0
        %503 = vdwg.mxu0
        %v504 = vlaneseq
        %v505 = vshrl.u32 %v504, 7
        %v506 = vlaneseq
        %v507 = vand.u32 %v506, 127
        %vm508 = vcmp.le.s32.totalorder %v507, %v505
        %vm509 = vcmp.ne.f32.partialorder %v499, 0.0
        %vm510 = vmand %vm508, %vm509
        %v511 = vsel %vm510, %v499, -inf
        %vm512 = vcmask 64512
        %v513 = vsel %vm512, %v511, -inf
        %514 = vmax.xlane.f32.xlu0 %v513
        %v515 = vpop.xlane.xlu0 %514
        %v516 = vsub.f32 %v511, %v515
        %v517 = vmul.f32 %v516, 1.442695
        %v518 = vpow.pop %v517
        %v519 = vsel %vm512, %v518, 0.0
        %520 = vadd.xlane.f32.xlu0 %v519
        %v521 = vpop.xlane.xlu0 %520
        %v522 = vrcp.pop %v521
        %v523 = vmul.f32 %v518, %v522
        %v524 = vpack.c.bf16 %v523, %v523
        %v525 = vpack.c.bf16 %v457, %v457
        %v527 = vsel %vm512, %v524, 0
        %vm529 = vcmask 1043456
        %v531 = vsel %vm529, %v525, 0
        %533 = vmatprep.subr.bf16.mxu0 0
        %534 = vmatpush1.bf16.msra.mxu0 %v531
        %535 = vmatprep.subr.bf16.mxu0 0
        %536 = vmatpush1.bf16.msra.mxu0 0
        %537 = vmatprep.subr.bf16.mxu0 0
        %538 = vmatpush1.bf16.msra.mxu0 0
        %539 = vmatprep.subr.bf16.mxu0 0
        %540 = vmatpush1.bf16.msra.mxu0 0
        %541 = vmatprep.subr.bf16.mxu0 0
        %542 = vmatpush1.bf16.msra.mxu0 0
        %543 = vmatprep.subr.bf16.mxu0 0
        %544 = vmatpush1.bf16.msra.mxu0 0
        %545 = vmatprep.subr.bf16.mxu0 0
        %546 = vmatpush1.bf16.msra.mxu0 0
        %547 = vmatprep.subr.bf16.mxu0 0
        %548 = vmatpush1.bf16.msra.mxu0 0
        %549 = vmatprep.subr.bf16.mxu0 0
        %550 = vmatpush1.bf16.msra.mxu0 0
        %551 = vmatprep.subr.bf16.mxu0 0
        %552 = vmatpush1.bf16.msra.mxu0 0
        %553 = vmatprep.subr.bf16.mxu0 0
        %554 = vmatpush1.bf16.msra.mxu0 0
        %555 = vmatprep.subr.bf16.mxu0 0
        %556 = vmatpush1.bf16.msra.mxu0 0
        %557 = vmatprep.subr.bf16.mxu0 0
        %558 = vmatpush1.bf16.msra.mxu0 0
        %559 = vmatprep.subr.bf16.mxu0 0
        %560 = vmatpush1.bf16.msra.mxu0 0
        %561 = vmatprep.subr.bf16.mxu0 0
        %562 = vmatpush1.bf16.msra.mxu0 0
        %563 = vmatprep.subr.bf16.mxu0 0
        %564 = vmatpush1.bf16.msra.mxu0 0
        %565 = vmatprep.mubr.bf16.mxu0 0
        %566 = vmatmul.mubr.bf16.gmra.mrb[0].mxu0 %v527
        %v567 = vpop.f32.mrb[0].mxu0
        %v568 = vadd.f32 0.0, %v567
        %v569 = vpop.f32.mrb[0].mxu0
        %v570 = vpop.f32.mrb[0].mxu0
        %v571 = vpop.f32.mrb[0].mxu0
        %572 = vdwg.mxu0
        %573 = vst [vmem:[%s200] sm:$0xff] %v568
        %s574 = sand.u32 %s97, 1
        %s575 = scalar_lea.sflag [#allocation4], %s574
        %s576 = sand.u32 %s97, 1
        %s577 = smul.addr %s576, 8
        %s578 = scalar_lea.vmem [#allocation7], %s577
        // Predicated region
        $region41: #{tpu_custom_call.1} parent=31 // pred_check
          %p579 = pneg %p107
        $region42: #{tpu_custom_call.1} parent=31 // pred_check_branch
          %581 = sbr.rel (%p579) target = $region44
        $region43: #{tpu_custom_call.1} parent=31 // pred_region
          %s583 = ssub.s32 128, 128
          %584 = vsyncadd %s575, %s583
          %s585 = smul.addr %s21, 128
          %s586 = scalar_lea.hbm %s3, %s585
          %s588 = sshll.u32 %s578, 4
          %s589 = int_to_ptr.vmem [resolvable:$true] %s588
          %591 = dma.vmem_to_hbm [thread:$0]  %s589, 128, %s586, %s575
        $region44: #{tpu_custom_call.1} parent=31 // pred_fallthru
          _
      $region32: #{tpu_custom_call.1} parent=5 // pred_fallthru
        _
      %p592 = scmp.le.s32.totalorder 2, %s16
      // Predicated region
      $region45: #{tpu_custom_call.1} parent=5 // pred_check
        %p593 = pneg %p592
      $region46: #{tpu_custom_call.1} parent=5 // pred_check_branch
        %595 = sbr.rel (%p593) target = $region48
      $region47: #{tpu_custom_call.1} parent=5 // pred_region
        %s596 = ssub.s32 %s16, 2
        // Predicated region
        $region49: #{tpu_custom_call.1} parent=47 // pred_check
          %p597 = pneg %p113
        $region50: #{tpu_custom_call.1} parent=47 // pred_check_branch
          %599 = sbr.rel (%p597) target = $region52
        $region51: #{tpu_custom_call.1} parent=47 // pred_region
          %s600 = sand.u32 %s98, 1
          %s601 = scalar_lea.sflag [#allocation4], %s600
          %s602 = sand.u32 %s98, 1
          %s603 = smul.addr %s602, 8
          %s604 = scalar_lea.vmem [#allocation7], %s603
          %605 = dma.done %s601, 128
        $region52: #{tpu_custom_call.1} parent=47 // pred_fallthru
          _
      $region48: #{tpu_custom_call.1} parent=5 // pred_fallthru
        _
    $region6: #{tpu_custom_call.1} parent=1 // loop_footer
      %s20 = sadd.s32 1, %s16
    $region7: #{tpu_custom_call.1} parent=1 // loop_footer_branch
      %15 = sbr.rel target = $region3
    $region8: #{tpu_custom_call.1} parent=1 // loop_exit
      _
    %606 = vsyncpa [#allocation3], 1
    %s607 = scalar_lea.sflag [#allocation3], 1
    %608 = vsyncpa %s607, 1
    %609 = vsyncpa [#allocation6], 1
    %610 = vsyncpa [#allocation4], 1
    %s611 = scalar_lea.sflag [#allocation4], 1
    %612 = vsyncpa %s611, 1

</llo_original>
